<compile_context>
chip_gen: v6e
topology: v6e:2x2x1
jax: 0.10.0
libtpu: 0.0.40
codegen_flags: <defaults>
</compile_context>

<pallas_src>
import functools

import jax
import jax.numpy as jnp
from jax.experimental import pallas as pl
from jax.experimental.pallas import tpu as pltpu

# Hyperparameters (scaled down from the original 512/60/512/3; structure is
# identical, lane width kept at a natural 128).
NUM_ACTORS = 3
MAX_SIZE   = 16    # original: 60
INPUT_SIZE = 128   # original: 512
HIDDEN     = 128   # original: 512
SEQ_LEN    = 8     # encoder output length (< MAX_SIZE), rest is zero-padded

LANE = 128
# Fast path: whole valid W1 in one block if it fits this budget.
FAST_PATH_BYTES = 8 * 1024 * 1024
# Streaming path: per-step W1 tile cap. 8 MB bf16 tiles keep the ~0.35 us/step
# grid overhead under ~5% of the tile DMA time on v6e/v7x while staying well
# inside the scoped VMEM limit below even double-buffered.
MAX_TILE_BYTES = 8 * 1024 * 1024
VMEM_LIMIT_BYTES = 48 * 1024 * 1024


def _round_up(x, m):
    return (x + m - 1) // m * m


def classifier_single_kernel(x_ref, w1_ref, b1_ref, w2_ref, b2_ref, out_ref):
    """Single-block fast path: full (1,K)@(K,H) GEMV + epilogue in one shot."""
    h = jnp.maximum(
        jnp.dot(x_ref[...], w1_ref[...], preferred_element_type=jnp.float32)
        + b1_ref[...], 0.0)
    logits = jnp.dot(h, w2_ref[...],
                     preferred_element_type=jnp.float32) + b2_ref[...]
    out_ref[...] = jax.nn.sigmoid(logits)


def classifier_stream_kernel(x_ref, w1_ref, b1_ref, w2_ref, b2_ref, out_ref,
                             acc_ref, *, tk):
    """K-streamed path: W1 tiles stream over the grid, f32 accumulator."""
    k = pl.program_id(0)

    # Init the f32 accumulator on the first K step.
    @pl.when(k == 0)
    def _():
        acc_ref[...] = jnp.zeros_like(acc_ref)

    # x is fully VMEM-resident (it is tiny); slice the matching K strip here
    # instead of issuing a separate (1, tk) DMA every grid step.
    start = pl.multiple_of(k * tk, LANE)
    acc_ref[...] += jnp.dot(x_ref[:, pl.ds(start, tk)], w1_ref[...],
                            preferred_element_type=jnp.float32)

    # Epilogue on the last K step: bias + relu + linear2 + sigmoid.
    @pl.when(k == pl.num_programs(0) - 1)
    def _():
        h = jnp.maximum(acc_ref[...] + b1_ref[...], 0.0)
        logits = jnp.dot(h, w2_ref[...],
                         preferred_element_type=jnp.float32) + b2_ref[...]
        out_ref[...] = jax.nn.sigmoid(logits)


def _pick_tk(k_pad, hidden, itemsize=2, max_block_bytes=MAX_TILE_BYTES):
    """Largest multiple of 128 dividing k_pad whose W1 tile fits the cap."""
    assert k_pad % LANE == 0, k_pad
    cap = max(LANE, max_block_bytes // (hidden * itemsize))
    tk = LANE
    for cand in range(LANE, min(k_pad, cap) + 1, LANE):
        if k_pad % cand == 0:
            tk = cand
    return tk


def classifier_head(enc_out, w1, b1, w2, b2, *, tk=None, force_stream=False):
    """enc_out: (L, INPUT_SIZE); w1: (MAX_SIZE*INPUT_SIZE, HIDDEN) (in, out);
    b1: (HIDDEN,); w2: (HIDDEN, NUM_ACTORS) (in, out); b2: (NUM_ACTORS,)."""
    L, in_size = enc_out.shape
    k_total, hidden = w1.shape
    n_out = w2.shape[1]
    k_valid = L * in_size
    assert k_valid <= k_total, (k_valid, k_total)

    # Lane-pad K (contraction) and N (output) dims to multiples of 128.
    k_pad = _round_up(k_valid, LANE)
    n_pad = _round_up(n_out, LANE)

    # Row-major flatten of the valid rows; the zero-padded tail of x is never
    # built — the matching rows of W1 are simply not contracted.
    # NOTE: activations are also cast to bf16 (intentional accuracy tradeoff,
    # checked against the f32 reference below).
    x_flat = jnp.zeros((1, k_pad), jnp.bfloat16).at[0, :k_valid].set(
        enc_out.reshape(k_valid).astype(jnp.bfloat16))
    w1_v = w1[:k_valid].astype(jnp.bfloat16)
    if k_pad != k_valid:
        w1_v = jnp.zeros((k_pad, hidden), jnp.bfloat16).at[:k_valid].set(w1_v)
    b1_r = b1.reshape(1, hidden).astype(jnp.float32)
    w2_p = jnp.zeros((hidden, n_pad), jnp.float32).at[:, :n_out].set(
        w2.astype(jnp.float32))
    b2_p = jnp.zeros((1, n_pad), jnp.float32).at[0, :n_out].set(
        b2.astype(jnp.float32))

    cparams = pltpu.CompilerParams(
        dimension_semantics=("arbitrary",),
        vmem_limit_bytes=VMEM_LIMIT_BYTES)

    w1_bytes = k_pad * hidden * 2  # bf16
    use_stream = force_stream or (w1_bytes > FAST_PATH_BYTES)

    if not use_stream:
        out = pl.pallas_call(
            classifier_single_kernel,
            out_shape=jax.ShapeDtypeStruct((1, n_pad), jnp.float32),
            grid=(1,),
            in_specs=[
                pl.BlockSpec((1, k_pad), lambda k: (0, 0)),       # x
                pl.BlockSpec((k_pad, hidden), lambda k: (0, 0)),  # W1 (whole)
                pl.BlockSpec((1, hidden), lambda k: (0, 0)),      # b1
                pl.BlockSpec((hidden, n_pad), lambda k: (0, 0)),  # W2
                pl.BlockSpec((1, n_pad), lambda k: (0, 0)),       # b2
            ],
            out_specs=pl.BlockSpec((1, n_pad), lambda k: (0, 0)),
            compiler_params=cparams,
        )(x_flat, w1_v, b1_r, w2_p, b2_p)
    else:
        if tk is None:
            tk = _pick_tk(k_pad, hidden)
        assert k_pad % tk == 0 and tk % LANE == 0, (k_pad, tk)
        grid_k = k_pad // tk

        out = pl.pallas_call(
            functools.partial(classifier_stream_kernel, tk=tk),
            out_shape=jax.ShapeDtypeStruct((1, n_pad), jnp.float32),
            grid=(grid_k,),
            in_specs=[
                pl.BlockSpec((1, k_pad), lambda k: (0, 0)),       # x (resident)
                pl.BlockSpec((tk, hidden), lambda k: (k, 0)),     # W1 (streamed)
                pl.BlockSpec((1, hidden), lambda k: (0, 0)),      # b1 (resident)
                pl.BlockSpec((hidden, n_pad), lambda k: (0, 0)),  # W2 (resident)
                pl.BlockSpec((1, n_pad), lambda k: (0, 0)),       # b2 (resident)
            ],
            out_specs=pl.BlockSpec((1, n_pad), lambda k: (0, 0)),
            scratch_shapes=[pltpu.VMEM((1, hidden), jnp.float32)],
            compiler_params=cparams,
        )(x_flat, w1_v, b1_r, w2_p, b2_p)

    return out[:, :n_out]


if __name__ == "__main__":
    key = jax.random.PRNGKey(0)
    k_enc, k_w1, k_w2 = jax.random.split(key, 3)

    # Stand-in for the encoder output (see TODO above).
    enc_out = jax.random.normal(k_enc, (SEQ_LEN, INPUT_SIZE), jnp.float32)

    # Deterministic parameter init mirroring init_weights (xavier_uniform,
    # bias = 0.01), with weights stored transposed to (in, out).
    fan_in1, fan_out1 = MAX_SIZE * INPUT_SIZE, HIDDEN
    bound1 = (6.0 / (fan_in1 + fan_out1)) ** 0.5
    w1 = jax.random.uniform(k_w1, (fan_in1, fan_out1), jnp.float32, -bound1, bound1)
    b1 = jnp.full((HIDDEN,), 0.01, jnp.float32)

    bound2 = (6.0 / (HIDDEN + NUM_ACTORS)) ** 0.5
    w2 = jax.random.uniform(k_w2, (HIDDEN, NUM_ACTORS), jnp.float32, -bound2, bound2)
    b2 = jnp.full((NUM_ACTORS,), 0.01, jnp.float32)

    # Fast path (what this size takes by default): single-block kernel.
    out_fast = classifier_head(enc_out, w1, b1, w2, b2)
    # Streaming path, forced at the toy size to exercise the accumulator
    # pipeline (K_pad = 1024, TK = 256 -> grid=(4,)).
    out_stream = classifier_head(enc_out, w1, b1, w2, b2, tk=256,
                                 force_stream=True)
    jax.block_until_ready((out_fast, out_stream))

    # Plain-JAX reference with the same bf16 weight/activation quantization
    # and the full zero-padded flatten (semantics of the torch module).
    x_pad = jnp.zeros((MAX_SIZE, INPUT_SIZE), jnp.float32).at[:SEQ_LEN].set(enc_out)
    x_flat_ref = x_pad.reshape(1, -1).astype(jnp.bfloat16)
    h_ref = jnp.maximum(
        jnp.dot(x_flat_ref, w1.astype(jnp.bfloat16),
                preferred_element_type=jnp.float32) + b1, 0.0)
    ref = jax.nn.sigmoid(
        jnp.dot(h_ref, w2, preferred_element_type=jnp.float32) + b2)

    # Full-precision reference (bf16 quantization only perturbs the sigmoid
    # output at the ~1e-3 level).
    h_f32 = jnp.maximum(x_pad.reshape(1, -1) @ w1 + b1, 0.0)
    ref_f32 = jax.nn.sigmoid(h_f32 @ w2 + b2)

    for out in (out_fast, out_stream):
        assert out.shape == (1, NUM_ACTORS), out.shape
        assert jnp.allclose(out, ref, atol=1e-4), (out, ref)
        assert jnp.allclose(out, ref_f32, atol=3e-2), (out, ref_f32)
    assert jnp.allclose(out_fast, out_stream, atol=1e-5), (out_fast, out_stream)

    print("KERNEL_OK")
</pallas_src>

<mosaic_0001>
module attributes {stable_mosaic.version = 11 : i64} {
  func.func @classifier_single_kernel(%arg0: i32, %arg1: memref<1x1024xbf16, #tpu.memory_space<vmem>>, %arg2: memref<1024x128xbf16, #tpu.memory_space<vmem>>, %arg3: memref<1x128xf32, #tpu.memory_space<vmem>>, %arg4: memref<128x128xf32, #tpu.memory_space<vmem>>, %arg5: memref<1x128xf32, #tpu.memory_space<vmem>>, %arg6: memref<1x128xf32, #tpu.memory_space<vmem>>) attributes {dimension_semantics = [#tpu.dimension_semantics<arbitrary>], iteration_bounds = array<i64: 1>, scalar_prefetch = 0 : i64, scratch_operands = 0 : i64, tpu.core_type = #tpu.core_type<tc>, window_params = [{pipeline_mode = #tpu.pipeline_mode<synchronous>, transform_indices = @transform_0, window_bounds = array<i64: 1, 1024>}, {pipeline_mode = #tpu.pipeline_mode<synchronous>, transform_indices = @transform_1, window_bounds = array<i64: 1024, 128>}, {pipeline_mode = #tpu.pipeline_mode<synchronous>, transform_indices = @transform_2, window_bounds = array<i64: 1, 128>}, {pipeline_mode = #tpu.pipeline_mode<synchronous>, transform_indices = @transform_3, window_bounds = array<i64: 128, 128>}, {pipeline_mode = #tpu.pipeline_mode<synchronous>, transform_indices = @transform_4, window_bounds = array<i64: 1, 128>}, {pipeline_mode = #tpu.pipeline_mode<synchronous>, transform_indices = @transform_5, window_bounds = array<i64: 1, 128>}]} {
    %c0 = arith.constant 0 : index
    %c0_0 = arith.constant 0 : index
    %0 = vector.load %arg1[%c0, %c0_0] : memref<1x1024xbf16, #tpu.memory_space<vmem>>, vector<1x1024xbf16>
    %c0_1 = arith.constant 0 : index
    %c0_2 = arith.constant 0 : index
    %1 = vector.load %arg2[%c0_1, %c0_2] : memref<1024x128xbf16, #tpu.memory_space<vmem>>, vector<1024x128xbf16>
    %cst = arith.constant dense<0.000000e+00> : vector<1x128xf32>
    %2 = tpu.matmul %0, %1, %cst {dimension_numbers = #tpu.dot_dimension_numbers<[1], [0], [0], [1], [0, 0, 1, 1], [], []>} : vector<1x1024xbf16>, vector<1024x128xbf16>, vector<1x128xf32> -> vector<1x128xf32>
    %c0_3 = arith.constant 0 : index
    %c0_4 = arith.constant 0 : index
    %3 = vector.load %arg3[%c0_3, %c0_4] : memref<1x128xf32, #tpu.memory_space<vmem>>, vector<1x128xf32>
    %4 = arith.addf %2, %3 : vector<1x128xf32>
    %cst_5 = arith.constant 0.000000e+00 : f32
    %5 = vector.broadcast %cst_5 : f32 to vector<1x128xf32>
    %6 = arith.maximumf %4, %5 : vector<1x128xf32>
    %c0_6 = arith.constant 0 : index
    %c0_7 = arith.constant 0 : index
    %7 = vector.load %arg4[%c0_6, %c0_7] : memref<128x128xf32, #tpu.memory_space<vmem>>, vector<128x128xf32>
    %cst_8 = arith.constant dense<0.000000e+00> : vector<1x128xf32>
    %8 = tpu.matmul %6, %7, %cst_8 {dimension_numbers = #tpu.dot_dimension_numbers<[1], [0], [0], [1], [0, 0, 1, 1], [], []>} : vector<1x128xf32>, vector<128x128xf32>, vector<1x128xf32> -> vector<1x128xf32>
    %c0_9 = arith.constant 0 : index
    %c0_10 = arith.constant 0 : index
    %9 = vector.load %arg5[%c0_9, %c0_10] : memref<1x128xf32, #tpu.memory_space<vmem>>, vector<1x128xf32>
    %10 = arith.addf %8, %9 : vector<1x128xf32>
    %11 = arith.negf %10 : vector<1x128xf32>
    %12 = math.exp %11 : vector<1x128xf32>
    %cst_11 = arith.constant 1.000000e+00 : f32
    %13 = vector.broadcast %cst_11 : f32 to vector<1x128xf32>
    %14 = arith.addf %13, %12 : vector<1x128xf32>
    %15 = arith.divf %13, %14 : vector<1x128xf32>
    %c0_12 = arith.constant 0 : index
    %c0_13 = arith.constant 0 : index
    %16 = vector.load %arg6[%c0_12, %c0_13] : memref<1x128xf32, #tpu.memory_space<vmem>>, vector<1x128xf32>
    tpu.vector_store %arg6[%c0_12, %c0_13], %15 {strides = array<i32>} : memref<1x128xf32, #tpu.memory_space<vmem>>, vector<1x128xf32>,
    return
  }
  func.func @transform_0(%arg0: i32) -> (i32, i32) {
    %c0_i32 = arith.constant 0 : i32
    %c0_i32_0 = arith.constant 0 : i32
    %c0_i32_1 = arith.constant 0 : i32
    return %c0_i32, %c0_i32_0 : i32, i32
  }
  func.func @transform_1(%arg0: i32) -> (i32, i32) {
    %c0_i32 = arith.constant 0 : i32
    %c0_i32_0 = arith.constant 0 : i32
    %c0_i32_1 = arith.constant 0 : i32
    return %c0_i32, %c0_i32_0 : i32, i32
  }
  func.func @transform_2(%arg0: i32) -> (i32, i32) {
    %c0_i32 = arith.constant 0 : i32
    %c0_i32_0 = arith.constant 0 : i32
    %c0_i32_1 = arith.constant 0 : i32
    return %c0_i32, %c0_i32_0 : i32, i32
  }
  func.func @transform_3(%arg0: i32) -> (i32, i32) {
    %c0_i32 = arith.constant 0 : i32
    %c0_i32_0 = arith.constant 0 : i32
    %c0_i32_1 = arith.constant 0 : i32
    return %c0_i32, %c0_i32_0 : i32, i32
  }
  func.func @transform_4(%arg0: i32) -> (i32, i32) {
    %c0_i32 = arith.constant 0 : i32
    %c0_i32_0 = arith.constant 0 : i32
    %c0_i32_1 = arith.constant 0 : i32
    return %c0_i32, %c0_i32_0 : i32, i32
  }
  func.func @transform_5(%arg0: i32) -> (i32, i32) {
    %c0_i32 = arith.constant 0 : i32
    %c0_i32_0 = arith.constant 0 : i32
    %c0_i32_1 = arith.constant 0 : i32
    return %c0_i32, %c0_i32_0 : i32, i32
  }
}

</mosaic_0001>

<llo_original>
// kernel: tpu_custom_call.1
$region0: #{tpu_custom_call.1}
  #allocation0 [shape = 'u32[]', space=smem, size = 0x4, offset = 0x4, fixed_abs, tag = 'smem constant byte address 0x4 - core index']
  #allocation1 [shape = 'u32[144,128]{1,0:T(1,128)}', space=vmem, size = 0x12000, scoped, tag = 'internal scratch']
  %s0 = inlined_call_operand.hbm [shape: bf16[1,1024], index: 0, kind: input, shape index: {}]
  %s1 = inlined_call_operand.hbm [shape: bf16[1024,128], index: 1, kind: input, shape index: {}]
  %s2 = inlined_call_operand.vmem [shape: f32[1,128], index: 2, kind: input, shape index: {}]
  %s3 = inlined_call_operand.hbm [shape: f32[128,128], index: 3, kind: input, shape index: {}]
  %s4 = inlined_call_operand.vmem [shape: f32[1,128], index: 4, kind: input, shape index: {}]
  %s5 = inlined_call_operand.hbm [shape: f32[1,128], index: 5, kind: output, shape index: {}]
  %s6 = sld [smem:[#allocation0]]
  $region42: #{tpu_custom_call.1} parent=0
    _
  %s8 = ssub.s32 1, %s6
  %s9 = scalar_select 0, %s8, %s6
  $region1: #{tpu_custom_call.1} parent=0
    #allocation2 [shape = 'u8[4096]{0}', space=vmem, size = 0x1000, scoped, tag = 'input window, operand 0, single buffered']
    #allocation3 [shape = 's32[1]{0}', space=sflag, size = 0x4, scoped, tag = 'scoped memory for tpu_custom_call.1']
    #allocation4 [shape = 's32[1]{0}', space=sflag, size = 0x4, scoped, tag = 'scoped memory for tpu_custom_call.1']
    #allocation5 [shape = 'u8[262144]{0}', space=vmem, size = 0x40000, scoped, tag = 'input window, operand 1, single buffered']
    #allocation6 [shape = 's32[1]{0}', space=sflag, size = 0x4, scoped, tag = 'scoped memory for tpu_custom_call.1']
    #allocation7 [shape = 'u8[65536]{0}', space=vmem, size = 0x10000, scoped, tag = 'input window, operand 3, single buffered']
    #allocation8 [shape = 'u8[512]{0}', space=vmem, size = 0x400, scoped, tag = 'output window, operand 0, single buffered']
    %10 = vsyncpa [#allocation3], 0
    %11 = vsyncpa [#allocation6], 0
    %12 = vsyncpa [#allocation4], 0
    // Predicated region
    $region2: #{tpu_custom_call.1} parent=1 // pred_check
      _
    $region3: #{tpu_custom_call.1} parent=1 // pred_check_branch
      %14 = sbr.rel (0) target = $region5
    $region4: #{tpu_custom_call.1} parent=1 // pred_region
      %s16 = ssub.s32 128, 128
      %17 = vsyncadd [#allocation3], %s16
      %s19 = sshll.u32 [#allocation2], 4
      %s20 = int_to_ptr.vmem [resolvable:$true] %s19
      %22 = dma.hbm_to_vmem [thread:$0]  %s0, 128, %s20, [#allocation3]
    $region5: #{tpu_custom_call.1} parent=1 // pred_fallthru
      _
    // Predicated region
    $region6: #{tpu_custom_call.1} parent=1 // pred_check
      _
    $region7: #{tpu_custom_call.1} parent=1 // pred_check_branch
      %24 = sbr.rel (0) target = $region9
    $region8: #{tpu_custom_call.1} parent=1 // pred_region
      %s26 = ssub.s32 8192, 8192
      %27 = vsyncadd [#allocation6], %s26
      %s28 = sshll.u32 [#allocation5], 4
      %s29 = int_to_ptr.vmem [resolvable:$true] %s28
      %34 = dma.hbm_to_vmem [thread:$0]  %s1, 8192, %s29, [#allocation6], 64, 64, 4
    $region9: #{tpu_custom_call.1} parent=1 // pred_fallthru
      _
    // Predicated region
    $region10: #{tpu_custom_call.1} parent=1 // pred_check
      _
    $region11: #{tpu_custom_call.1} parent=1 // pred_check_branch
      %36 = sbr.rel (0) target = $region13
    $region12: #{tpu_custom_call.1} parent=1 // pred_region
      _
    $region13: #{tpu_custom_call.1} parent=1 // pred_fallthru
      _
    // Predicated region
    $region14: #{tpu_custom_call.1} parent=1 // pred_check
      _
    $region15: #{tpu_custom_call.1} parent=1 // pred_check_branch
      %38 = sbr.rel (0) target = $region17
    $region16: #{tpu_custom_call.1} parent=1 // pred_region
      %s40 = ssub.s32 2048, 2048
      %41 = vsyncadd [#allocation6], %s40
      %s42 = sshll.u32 [#allocation7], 4
      %s43 = int_to_ptr.vmem [resolvable:$true] %s42
      %48 = dma.hbm_to_vmem [thread:$0]  %s3, 2048, %s43, [#allocation6], 128, 128, 8
    $region17: #{tpu_custom_call.1} parent=1 // pred_fallthru
      _
    // Predicated region
    $region18: #{tpu_custom_call.1} parent=1 // pred_check
      _
    $region19: #{tpu_custom_call.1} parent=1 // pred_check_branch
      %50 = sbr.rel (0) target = $region21
    $region20: #{tpu_custom_call.1} parent=1 // pred_region
      _
    $region21: #{tpu_custom_call.1} parent=1 // pred_fallthru
      _
    // Predicated region
    $region22: #{tpu_custom_call.1} parent=1 // pred_check
      _
    $region23: #{tpu_custom_call.1} parent=1 // pred_check_branch
      %52 = sbr.rel (0) target = $region25
    $region24: #{tpu_custom_call.1} parent=1 // pred_region
      %53 = dma.done [#allocation3], 128
    $region25: #{tpu_custom_call.1} parent=1 // pred_fallthru
      _
    // Predicated region
    $region26: #{tpu_custom_call.1} parent=1 // pred_check
      _
    $region27: #{tpu_custom_call.1} parent=1 // pred_check_branch
      %55 = sbr.rel (0) target = $region29
    $region28: #{tpu_custom_call.1} parent=1 // pred_region
      %56 = dma.done [#allocation6], 8192
    $region29: #{tpu_custom_call.1} parent=1 // pred_fallthru
      _
    // Predicated region
    $region30: #{tpu_custom_call.1} parent=1 // pred_check
      _
    $region31: #{tpu_custom_call.1} parent=1 // pred_check_branch
      %58 = sbr.rel (0) target = $region33
    $region32: #{tpu_custom_call.1} parent=1 // pred_region
      %59 = dma.done [#allocation6], 2048
    $region33: #{tpu_custom_call.1} parent=1 // pred_fallthru
      _
    %v61 = vld [vmem:[#allocation2] sm:$0xff]
    %v62 = vld [vmem:[#allocation5] sm:$0xf]
    %v63 = vld [vmem:[#allocation5 + $0x4] sm:$0xf]
    %v64 = vld [vmem:[#allocation5 + $0x8] sm:$0xf]
    %v65 = vld [vmem:[#allocation5 + $0xc] sm:$0xf]
    %v66 = vld [vmem:[#allocation5 + $0x10] sm:$0xf]
    %v67 = vld [vmem:[#allocation5 + $0x14] sm:$0xf]
    %v68 = vld [vmem:[#allocation5 + $0x18] sm:$0xf]
    %v69 = vld [vmem:[#allocation5 + $0x1c] sm:$0xf]
    %v70 = vld [vmem:[#allocation5 + $0x20] sm:$0xf]
    %v71 = vld [vmem:[#allocation5 + $0x24] sm:$0xf]
    %v72 = vld [vmem:[#allocation5 + $0x28] sm:$0xf]
    %v73 = vld [vmem:[#allocation5 + $0x2c] sm:$0xf]
    %v74 = vld [vmem:[#allocation5 + $0x30] sm:$0xf]
    %v75 = vld [vmem:[#allocation5 + $0x34] sm:$0xf]
    %v76 = vld [vmem:[#allocation5 + $0x38] sm:$0xf]
    %v77 = vld [vmem:[#allocation5 + $0x3c] sm:$0xf]
    %v78 = vld [vmem:[#allocation5 + $0x40] sm:$0xf]
    %v79 = vld [vmem:[#allocation5 + $0x44] sm:$0xf]
    %v80 = vld [vmem:[#allocation5 + $0x48] sm:$0xf]
    %v81 = vld [vmem:[#allocation5 + $0x4c] sm:$0xf]
    %v82 = vld [vmem:[#allocation5 + $0x50] sm:$0xf]
    %v83 = vld [vmem:[#allocation5 + $0x54] sm:$0xf]
    %v84 = vld [vmem:[#allocation5 + $0x58] sm:$0xf]
    %v85 = vld [vmem:[#allocation5 + $0x5c] sm:$0xf]
    %v86 = vld [vmem:[#allocation5 + $0x60] sm:$0xf]
    %v87 = vld [vmem:[#allocation5 + $0x64] sm:$0xf]
    %v88 = vld [vmem:[#allocation5 + $0x68] sm:$0xf]
    %v89 = vld [vmem:[#allocation5 + $0x6c] sm:$0xf]
    %v90 = vld [vmem:[#allocation5 + $0x70] sm:$0xf]
    %v91 = vld [vmem:[#allocation5 + $0x74] sm:$0xf]
    %v92 = vld [vmem:[#allocation5 + $0x78] sm:$0xf]
    %v93 = vld [vmem:[#allocation5 + $0x7c] sm:$0xf]
    %v94 = vld [vmem:[#allocation5 + $0x80] sm:$0xf]
    %v95 = vld [vmem:[#allocation5 + $0x84] sm:$0xf]
    %v96 = vld [vmem:[#allocation5 + $0x88] sm:$0xf]
    %v97 = vld [vmem:[#allocation5 + $0x8c] sm:$0xf]
    %v98 = vld [vmem:[#allocation5 + $0x90] sm:$0xf]
    %v99 = vld [vmem:[#allocation5 + $0x94] sm:$0xf]
    %v100 = vld [vmem:[#allocation5 + $0x98] sm:$0xf]
    %v101 = vld [vmem:[#allocation5 + $0x9c] sm:$0xf]
    %v102 = vld [vmem:[#allocation5 + $0xa0] sm:$0xf]
    %v103 = vld [vmem:[#allocation5 + $0xa4] sm:$0xf]
    %v104 = vld [vmem:[#allocation5 + $0xa8] sm:$0xf]
    %v105 = vld [vmem:[#allocation5 + $0xac] sm:$0xf]
    %v106 = vld [vmem:[#allocation5 + $0xb0] sm:$0xf]
    %v107 = vld [vmem:[#allocation5 + $0xb4] sm:$0xf]
    %v108 = vld [vmem:[#allocation5 + $0xb8] sm:$0xf]
    %v109 = vld [vmem:[#allocation5 + $0xbc] sm:$0xf]
    %v110 = vld [vmem:[#allocation5 + $0xc0] sm:$0xf]
    %v111 = vld [vmem:[#allocation5 + $0xc4] sm:$0xf]
    %v112 = vld [vmem:[#allocation5 + $0xc8] sm:$0xf]
    %v113 = vld [vmem:[#allocation5 + $0xcc] sm:$0xf]
    %v114 = vld [vmem:[#allocation5 + $0xd0] sm:$0xf]
    %v115 = vld [vmem:[#allocation5 + $0xd4] sm:$0xf]
    %v116 = vld [vmem:[#allocation5 + $0xd8] sm:$0xf]
    %v117 = vld [vmem:[#allocation5 + $0xdc] sm:$0xf]
    %v118 = vld [vmem:[#allocation5 + $0xe0] sm:$0xf]
    %v119 = vld [vmem:[#allocation5 + $0xe4] sm:$0xf]
    %v120 = vld [vmem:[#allocation5 + $0xe8] sm:$0xf]
    %v121 = vld [vmem:[#allocation5 + $0xec] sm:$0xf]
    %v122 = vld [vmem:[#allocation5 + $0xf0] sm:$0xf]
    %v123 = vld [vmem:[#allocation5 + $0xf4] sm:$0xf]
    %v124 = vld [vmem:[#allocation5 + $0xf8] sm:$0xf]
    %v125 = vld [vmem:[#allocation5 + $0xfc] sm:$0xf]
    %v126 = vld [vmem:[#allocation5 + $0x100] sm:$0xf]
    %v127 = vld [vmem:[#allocation5 + $0x104] sm:$0xf]
    %v128 = vld [vmem:[#allocation5 + $0x108] sm:$0xf]
    %v129 = vld [vmem:[#allocation5 + $0x10c] sm:$0xf]
    %v130 = vld [vmem:[#allocation5 + $0x110] sm:$0xf]
    %v131 = vld [vmem:[#allocation5 + $0x114] sm:$0xf]
    %v132 = vld [vmem:[#allocation5 + $0x118] sm:$0xf]
    %v133 = vld [vmem:[#allocation5 + $0x11c] sm:$0xf]
    %v134 = vld [vmem:[#allocation5 + $0x120] sm:$0xf]
    %v135 = vld [vmem:[#allocation5 + $0x124] sm:$0xf]
    %v136 = vld [vmem:[#allocation5 + $0x128] sm:$0xf]
    %v137 = vld [vmem:[#allocation5 + $0x12c] sm:$0xf]
    %v138 = vld [vmem:[#allocation5 + $0x130] sm:$0xf]
    %v139 = vld [vmem:[#allocation5 + $0x134] sm:$0xf]
    %v140 = vld [vmem:[#allocation5 + $0x138] sm:$0xf]
    %v141 = vld [vmem:[#allocation5 + $0x13c] sm:$0xf]
    %v142 = vld [vmem:[#allocation5 + $0x140] sm:$0xf]
    %v143 = vld [vmem:[#allocation5 + $0x144] sm:$0xf]
    %v144 = vld [vmem:[#allocation5 + $0x148] sm:$0xf]
    %v145 = vld [vmem:[#allocation5 + $0x14c] sm:$0xf]
    %v146 = vld [vmem:[#allocation5 + $0x150] sm:$0xf]
    %v147 = vld [vmem:[#allocation5 + $0x154] sm:$0xf]
    %v148 = vld [vmem:[#allocation5 + $0x158] sm:$0xf]
    %v149 = vld [vmem:[#allocation5 + $0x15c] sm:$0xf]
    %v150 = vld [vmem:[#allocation5 + $0x160] sm:$0xf]
    %v151 = vld [vmem:[#allocation5 + $0x164] sm:$0xf]
    %v152 = vld [vmem:[#allocation5 + $0x168] sm:$0xf]
    %v153 = vld [vmem:[#allocation5 + $0x16c] sm:$0xf]
    %v154 = vld [vmem:[#allocation5 + $0x170] sm:$0xf]
    %v155 = vld [vmem:[#allocation5 + $0x174] sm:$0xf]
    %v156 = vld [vmem:[#allocation5 + $0x178] sm:$0xf]
    %v157 = vld [vmem:[#allocation5 + $0x17c] sm:$0xf]
    %v158 = vld [vmem:[#allocation5 + $0x180] sm:$0xf]
    %v159 = vld [vmem:[#allocation5 + $0x184] sm:$0xf]
    %v160 = vld [vmem:[#allocation5 + $0x188] sm:$0xf]
    %v161 = vld [vmem:[#allocation5 + $0x18c] sm:$0xf]
    %v162 = vld [vmem:[#allocation5 + $0x190] sm:$0xf]
    %v163 = vld [vmem:[#allocation5 + $0x194] sm:$0xf]
    %v164 = vld [vmem:[#allocation5 + $0x198] sm:$0xf]
    %v165 = vld [vmem:[#allocation5 + $0x19c] sm:$0xf]
    %v166 = vld [vmem:[#allocation5 + $0x1a0] sm:$0xf]
    %v167 = vld [vmem:[#allocation5 + $0x1a4] sm:$0xf]
    %v168 = vld [vmem:[#allocation5 + $0x1a8] sm:$0xf]
    %v169 = vld [vmem:[#allocation5 + $0x1ac] sm:$0xf]
    %v170 = vld [vmem:[#allocation5 + $0x1b0] sm:$0xf]
    %v171 = vld [vmem:[#allocation5 + $0x1b4] sm:$0xf]
    %v172 = vld [vmem:[#allocation5 + $0x1b8] sm:$0xf]
    %v173 = vld [vmem:[#allocation5 + $0x1bc] sm:$0xf]
    %v174 = vld [vmem:[#allocation5 + $0x1c0] sm:$0xf]
    %v175 = vld [vmem:[#allocation5 + $0x1c4] sm:$0xf]
    %v176 = vld [vmem:[#allocation5 + $0x1c8] sm:$0xf]
    %v177 = vld [vmem:[#allocation5 + $0x1cc] sm:$0xf]
    %v178 = vld [vmem:[#allocation5 + $0x1d0] sm:$0xf]
    %v179 = vld [vmem:[#allocation5 + $0x1d4] sm:$0xf]
    %v180 = vld [vmem:[#allocation5 + $0x1d8] sm:$0xf]
    %v181 = vld [vmem:[#allocation5 + $0x1dc] sm:$0xf]
    %v182 = vld [vmem:[#allocation5 + $0x1e0] sm:$0xf]
    %v183 = vld [vmem:[#allocation5 + $0x1e4] sm:$0xf]
    %v184 = vld [vmem:[#allocation5 + $0x1e8] sm:$0xf]
    %v185 = vld [vmem:[#allocation5 + $0x1ec] sm:$0xf]
    %v186 = vld [vmem:[#allocation5 + $0x1f0] sm:$0xf]
    %v187 = vld [vmem:[#allocation5 + $0x1f4] sm:$0xf]
    %v188 = vld [vmem:[#allocation5 + $0x1f8] sm:$0xf]
    %v189 = vld [vmem:[#allocation5 + $0x1fc] sm:$0xf]
    %v190 = vld [vmem:[%s2] sm:$0x1]
    %v192 = vcombine.high %v61, %v61
    %v194 = vunpack.c.l.s4 1966171168
    %v195 = vunpack.c.0.s8 %v194
    %v196 = vlaneseq
    %v197 = vshrl.u32 %v196, 7
    %v198 = vsub.s32 %v195, %v197
    %v199 = vrot.slane %v61, %v198
    %v201 = vunpack.c.l.s4 1966171168
    %v202 = vunpack.c.0.s8 %v201
    %v203 = vlaneseq
    %v204 = vshrl.u32 %v203, 7
    %v205 = vsub.s32 %v202, %v204
    %v206 = vrot.slane %v192, %v205
    %v207 = vcombine.high %v199, %v199
    %v208 = vcombine.high %v206, %v206
    %v210 = vunpack.c.l.s4 1966171168
    %v211 = vunpack.c.0.s8 %v210
    %v212 = vlaneseq
    %v213 = vshrl.u32 %v212, 7
    %v214 = vsub.s32 %v211, %v213
    %v215 = vrot.slane %v199, %v214
    %v217 = vunpack.c.l.s4 1966171168
    %v218 = vunpack.c.0.s8 %v217
    %v219 = vlaneseq
    %v220 = vshrl.u32 %v219, 7
    %v221 = vsub.s32 %v218, %v220
    %v222 = vrot.slane %v206, %v221
    %v224 = vunpack.c.l.s4 1966171168
    %v225 = vunpack.c.0.s8 %v224
    %v226 = vlaneseq
    %v227 = vshrl.u32 %v226, 7
    %v228 = vsub.s32 %v225, %v227
    %v229 = vrot.slane %v207, %v228
    %v231 = vunpack.c.l.s4 1966171168
    %v232 = vunpack.c.0.s8 %v231
    %v233 = vlaneseq
    %v234 = vshrl.u32 %v233, 7
    %v235 = vsub.s32 %v232, %v234
    %v236 = vrot.slane %v208, %v235
    %v237 = vcombine.high %v215, %v215
    %v238 = vcombine.high %v222, %v222
    %v239 = vcombine.high %v229, %v229
    %v240 = vcombine.high %v236, %v236
    %v377 = vunpack.c.l.b16 %v62
    %v378 = vunpack.c.l.b16 %v63
    %v379 = vunpack.c.l.b16 %v64
    %v380 = vunpack.c.l.b16 %v65
    %v381 = vunpack.c.l.b16 %v66
    %v382 = vunpack.c.l.b16 %v67
    %v383 = vunpack.c.l.b16 %v68
    %v384 = vunpack.c.l.b16 %v69
    %v385 = vunpack.c.l.b16 %v70
    %v386 = vunpack.c.l.b16 %v71
    %v387 = vunpack.c.l.b16 %v72
    %v388 = vunpack.c.l.b16 %v73
    %v389 = vunpack.c.l.b16 %v74
    %v390 = vunpack.c.l.b16 %v75
    %v391 = vunpack.c.l.b16 %v76
    %v392 = vunpack.c.l.b16 %v77
    %v393 = vunpack.c.l.b16 %v78
    %v394 = vunpack.c.l.b16 %v79
    %v395 = vunpack.c.l.b16 %v80
    %v396 = vunpack.c.l.b16 %v81
    %v397 = vunpack.c.l.b16 %v82
    %v398 = vunpack.c.l.b16 %v83
    %v399 = vunpack.c.l.b16 %v84
    %v400 = vunpack.c.l.b16 %v85
    %v401 = vunpack.c.l.b16 %v86
    %v402 = vunpack.c.l.b16 %v87
    %v403 = vunpack.c.l.b16 %v88
    %v404 = vunpack.c.l.b16 %v89
    %v405 = vunpack.c.l.b16 %v90
    %v406 = vunpack.c.l.b16 %v91
    %v407 = vunpack.c.l.b16 %v92
    %v408 = vunpack.c.l.b16 %v93
    %v409 = vunpack.c.l.b16 %v94
    %v410 = vunpack.c.l.b16 %v95
    %v411 = vunpack.c.l.b16 %v96
    %v412 = vunpack.c.l.b16 %v97
    %v413 = vunpack.c.l.b16 %v98
    %v414 = vunpack.c.l.b16 %v99
    %v415 = vunpack.c.l.b16 %v100
    %v416 = vunpack.c.l.b16 %v101
    %v417 = vunpack.c.l.b16 %v102
    %v418 = vunpack.c.l.b16 %v103
    %v419 = vunpack.c.l.b16 %v104
    %v420 = vunpack.c.l.b16 %v105
    %v421 = vunpack.c.l.b16 %v106
    %v422 = vunpack.c.l.b16 %v107
    %v423 = vunpack.c.l.b16 %v108
    %v424 = vunpack.c.l.b16 %v109
    %v425 = vunpack.c.l.b16 %v110
    %v426 = vunpack.c.l.b16 %v111
    %v427 = vunpack.c.l.b16 %v112
    %v428 = vunpack.c.l.b16 %v113
    %v429 = vunpack.c.l.b16 %v114
    %v430 = vunpack.c.l.b16 %v115
    %v431 = vunpack.c.l.b16 %v116
    %v432 = vunpack.c.l.b16 %v117
    %v433 = vunpack.c.l.b16 %v118
    %v434 = vunpack.c.l.b16 %v119
    %v435 = vunpack.c.l.b16 %v120
    %v436 = vunpack.c.l.b16 %v121
    %v437 = vunpack.c.l.b16 %v122
    %v438 = vunpack.c.l.b16 %v123
    %v439 = vunpack.c.l.b16 %v124
    %v440 = vunpack.c.l.b16 %v125
    %v441 = vunpack.c.l.b16 %v126
    %v442 = vunpack.c.l.b16 %v127
    %v443 = vunpack.c.l.b16 %v128
    %v444 = vunpack.c.l.b16 %v129
    %v445 = vunpack.c.l.b16 %v130
    %v446 = vunpack.c.l.b16 %v131
    %v447 = vunpack.c.l.b16 %v132
    %v448 = vunpack.c.l.b16 %v133
    %v449 = vunpack.c.l.b16 %v134
    %v450 = vunpack.c.l.b16 %v135
    %v451 = vunpack.c.l.b16 %v136
    %v452 = vunpack.c.l.b16 %v137
    %v453 = vunpack.c.l.b16 %v138
    %v454 = vunpack.c.l.b16 %v139
    %v455 = vunpack.c.l.b16 %v140
    %v456 = vunpack.c.l.b16 %v141
    %v457 = vunpack.c.l.b16 %v142
    %v458 = vunpack.c.l.b16 %v143
    %v459 = vunpack.c.l.b16 %v144
    %v460 = vunpack.c.l.b16 %v145
    %v461 = vunpack.c.l.b16 %v146
    %v462 = vunpack.c.l.b16 %v147
    %v463 = vunpack.c.l.b16 %v148
    %v464 = vunpack.c.l.b16 %v149
    %v465 = vunpack.c.l.b16 %v150
    %v466 = vunpack.c.l.b16 %v151
    %v467 = vunpack.c.l.b16 %v152
    %v468 = vunpack.c.l.b16 %v153
    %v469 = vunpack.c.l.b16 %v154
    %v470 = vunpack.c.l.b16 %v155
    %v471 = vunpack.c.l.b16 %v156
    %v472 = vunpack.c.l.b16 %v157
    %v473 = vunpack.c.l.b16 %v158
    %v474 = vunpack.c.l.b16 %v159
    %v475 = vunpack.c.l.b16 %v160
    %v476 = vunpack.c.l.b16 %v161
    %v477 = vunpack.c.l.b16 %v162
    %v478 = vunpack.c.l.b16 %v163
    %v479 = vunpack.c.l.b16 %v164
    %v480 = vunpack.c.l.b16 %v165
    %v481 = vunpack.c.l.b16 %v166
    %v482 = vunpack.c.l.b16 %v167
    %v483 = vunpack.c.l.b16 %v168
    %v484 = vunpack.c.l.b16 %v169
    %v485 = vunpack.c.l.b16 %v170
    %v486 = vunpack.c.l.b16 %v171
    %v487 = vunpack.c.l.b16 %v172
    %v488 = vunpack.c.l.b16 %v173
    %v489 = vunpack.c.l.b16 %v174
    %v490 = vunpack.c.l.b16 %v175
    %v491 = vunpack.c.l.b16 %v176
    %v492 = vunpack.c.l.b16 %v177
    %v493 = vunpack.c.l.b16 %v178
    %v494 = vunpack.c.l.b16 %v179
    %v495 = vunpack.c.l.b16 %v180
    %v496 = vunpack.c.l.b16 %v181
    %v497 = vunpack.c.l.b16 %v182
    %v498 = vunpack.c.l.b16 %v183
    %v499 = vunpack.c.l.b16 %v184
    %v500 = vunpack.c.l.b16 %v185
    %v501 = vunpack.c.l.b16 %v186
    %v502 = vunpack.c.l.b16 %v187
    %v503 = vunpack.c.l.b16 %v188
    %v504 = vunpack.c.l.b16 %v189
    %v505 = vpack.c.b16 %v378, %v377
    %v506 = vpack.c.b16 %v380, %v379
    %v507 = vpack.c.b16 %v382, %v381
    %v508 = vpack.c.b16 %v384, %v383
    %v509 = vpack.c.b16 %v386, %v385
    %v510 = vpack.c.b16 %v388, %v387
    %v511 = vpack.c.b16 %v390, %v389
    %v512 = vpack.c.b16 %v392, %v391
    %v513 = vpack.c.b16 %v394, %v393
    %v514 = vpack.c.b16 %v396, %v395
    %v515 = vpack.c.b16 %v398, %v397
    %v516 = vpack.c.b16 %v400, %v399
    %v517 = vpack.c.b16 %v402, %v401
    %v518 = vpack.c.b16 %v404, %v403
    %v519 = vpack.c.b16 %v406, %v405
    %v520 = vpack.c.b16 %v408, %v407
    %v521 = vpack.c.b16 %v410, %v409
    %v522 = vpack.c.b16 %v412, %v411
    %v523 = vpack.c.b16 %v414, %v413
    %v524 = vpack.c.b16 %v416, %v415
    %v525 = vpack.c.b16 %v418, %v417
    %v526 = vpack.c.b16 %v420, %v419
    %v527 = vpack.c.b16 %v422, %v421
    %v528 = vpack.c.b16 %v424, %v423
    %v529 = vpack.c.b16 %v426, %v425
    %v530 = vpack.c.b16 %v428, %v427
    %v531 = vpack.c.b16 %v430, %v429
    %v532 = vpack.c.b16 %v432, %v431
    %v533 = vpack.c.b16 %v434, %v433
    %v534 = vpack.c.b16 %v436, %v435
    %v535 = vpack.c.b16 %v438, %v437
    %v536 = vpack.c.b16 %v440, %v439
    %v537 = vpack.c.b16 %v442, %v441
    %v538 = vpack.c.b16 %v444, %v443
    %v539 = vpack.c.b16 %v446, %v445
    %v540 = vpack.c.b16 %v448, %v447
    %v541 = vpack.c.b16 %v450, %v449
    %v542 = vpack.c.b16 %v452, %v451
    %v543 = vpack.c.b16 %v454, %v453
    %v544 = vpack.c.b16 %v456, %v455
    %v545 = vpack.c.b16 %v458, %v457
    %v546 = vpack.c.b16 %v460, %v459
    %v547 = vpack.c.b16 %v462, %v461
    %v548 = vpack.c.b16 %v464, %v463
    %v549 = vpack.c.b16 %v466, %v465
    %v550 = vpack.c.b16 %v468, %v467
    %v551 = vpack.c.b16 %v470, %v469
    %v552 = vpack.c.b16 %v472, %v471
    %v553 = vpack.c.b16 %v474, %v473
    %v554 = vpack.c.b16 %v476, %v475
    %v555 = vpack.c.b16 %v478, %v477
    %v556 = vpack.c.b16 %v480, %v479
    %v557 = vpack.c.b16 %v482, %v481
    %v558 = vpack.c.b16 %v484, %v483
    %v559 = vpack.c.b16 %v486, %v485
    %v560 = vpack.c.b16 %v488, %v487
    %v561 = vpack.c.b16 %v490, %v489
    %v562 = vpack.c.b16 %v492, %v491
    %v563 = vpack.c.b16 %v494, %v493
    %v564 = vpack.c.b16 %v496, %v495
    %v565 = vpack.c.b16 %v498, %v497
    %v566 = vpack.c.b16 %v500, %v499
    %v567 = vpack.c.b16 %v502, %v501
    %v568 = vpack.c.b16 %v504, %v503
    %633 = vmatprep.subr.bf16.mxu0 0
    %634 = vmatpush1.bf16.msra.mxu0 %v512
    %635 = vmatprep.subr.bf16.mxu0 0
    %636 = vmatpush1.bf16.msra.mxu0 %v511
    %637 = vmatprep.subr.bf16.mxu0 0
    %638 = vmatpush1.bf16.msra.mxu0 %v510
    %639 = vmatprep.subr.bf16.mxu0 0
    %640 = vmatpush1.bf16.msra.mxu0 %v509
    %641 = vmatprep.subr.bf16.mxu0 0
    %642 = vmatpush1.bf16.msra.mxu0 %v508
    %643 = vmatprep.subr.bf16.mxu0 0
    %644 = vmatpush1.bf16.msra.mxu0 %v507
    %645 = vmatprep.subr.bf16.mxu0 0
    %646 = vmatpush1.bf16.msra.mxu0 %v506
    %647 = vmatprep.subr.bf16.mxu0 0
    %648 = vmatpush1.bf16.msra.mxu0 %v505
    %649 = vmatprep.subr.bf16.mxu0 0
    %650 = vmatpush2.bf16.msra.mxu0 %v520
    %651 = vmatprep.subr.bf16.mxu0 0
    %652 = vmatpush2.bf16.msra.mxu0 %v519
    %653 = vmatprep.subr.bf16.mxu0 0
    %654 = vmatpush2.bf16.msra.mxu0 %v518
    %655 = vmatprep.subr.bf16.mxu0 0
    %656 = vmatpush2.bf16.msra.mxu0 %v517
    %657 = vmatprep.subr.bf16.mxu0 0
    %658 = vmatpush2.bf16.msra.mxu0 %v516
    %659 = vmatprep.subr.bf16.mxu0 0
    %660 = vmatpush2.bf16.msra.mxu0 %v515
    %661 = vmatprep.subr.bf16.mxu0 0
    %662 = vmatpush2.bf16.msra.mxu0 %v514
    %663 = vmatprep.subr.bf16.mxu0 0
    %664 = vmatpush2.bf16.msra.mxu0 %v513
    %665 = vmatprep.mubr.bf16.mxu0 %v229
    %666 = vmatmul.mubr.bf16.gmra.mxu0 %v215
    %v667 = vpop.f32.mrf.mxu0
    %v668 = vadd.f32 %v190, %v667
    %v669 = vpop.f32.mrf.mxu0
    %v670 = vpop.f32.mrf.mxu0
    %v671 = vpop.f32.mrf.mxu0
    %672 = vdwg.mxu0
    %673 = vmatprep.subr.bf16.mxu0 0
    %674 = vmatpush1.bf16.msra.mxu0 %v528
    %675 = vmatprep.subr.bf16.mxu0 0
    %676 = vmatpush1.bf16.msra.mxu0 %v527
    %677 = vmatprep.subr.bf16.mxu0 0
    %678 = vmatpush1.bf16.msra.mxu0 %v526
    %679 = vmatprep.subr.bf16.mxu0 0
    %680 = vmatpush1.bf16.msra.mxu0 %v525
    %681 = vmatprep.subr.bf16.mxu0 0
    %682 = vmatpush1.bf16.msra.mxu0 %v524
    %683 = vmatprep.subr.bf16.mxu0 0
    %684 = vmatpush1.bf16.msra.mxu0 %v523
    %685 = vmatprep.subr.bf16.mxu0 0
    %686 = vmatpush1.bf16.msra.mxu0 %v522
    %687 = vmatprep.subr.bf16.mxu0 0
    %688 = vmatpush1.bf16.msra.mxu0 %v521
    %689 = vmatprep.subr.bf16.mxu0 0
    %690 = vmatpush2.bf16.msra.mxu0 %v536
    %691 = vmatprep.subr.bf16.mxu0 0
    %692 = vmatpush2.bf16.msra.mxu0 %v535
    %693 = vmatprep.subr.bf16.mxu0 0
    %694 = vmatpush2.bf16.msra.mxu0 %v534
    %695 = vmatprep.subr.bf16.mxu0 0
    %696 = vmatpush2.bf16.msra.mxu0 %v533
    %697 = vmatprep.subr.bf16.mxu0 0
    %698 = vmatpush2.bf16.msra.mxu0 %v532
    %699 = vmatprep.subr.bf16.mxu0 0
    %700 = vmatpush2.bf16.msra.mxu0 %v531
    %701 = vmatprep.subr.bf16.mxu0 0
    %702 = vmatpush2.bf16.msra.mxu0 %v530
    %703 = vmatprep.subr.bf16.mxu0 0
    %704 = vmatpush2.bf16.msra.mxu0 %v529
    %705 = vmatprep.mubr.bf16.mxu0 %v239
    %706 = vmatmul.mubr.bf16.gmra.mxu0 %v237
    %v707 = vpop.f32.mrf.mxu0
    %v708 = vadd.f32 %v668, %v707
    %v709 = vpop.f32.mrf.mxu0
    %v710 = vpop.f32.mrf.mxu0
    %v711 = vpop.f32.mrf.mxu0
    %712 = vdwg.mxu0
    %713 = vmatprep.subr.bf16.mxu0 0
    %714 = vmatpush1.bf16.msra.mxu0 %v544
    %715 = vmatprep.subr.bf16.mxu0 0
    %716 = vmatpush1.bf16.msra.mxu0 %v543
    %717 = vmatprep.subr.bf16.mxu0 0
    %718 = vmatpush1.bf16.msra.mxu0 %v542
    %719 = vmatprep.subr.bf16.mxu0 0
    %720 = vmatpush1.bf16.msra.mxu0 %v541
    %721 = vmatprep.subr.bf16.mxu0 0
    %722 = vmatpush1.bf16.msra.mxu0 %v540
    %723 = vmatprep.subr.bf16.mxu0 0
    %724 = vmatpush1.bf16.msra.mxu0 %v539
    %725 = vmatprep.subr.bf16.mxu0 0
    %726 = vmatpush1.bf16.msra.mxu0 %v538
    %727 = vmatprep.subr.bf16.mxu0 0
    %728 = vmatpush1.bf16.msra.mxu0 %v537
    %729 = vmatprep.subr.bf16.mxu0 0
    %730 = vmatpush2.bf16.msra.mxu0 %v552
    %731 = vmatprep.subr.bf16.mxu0 0
    %732 = vmatpush2.bf16.msra.mxu0 %v551
    %733 = vmatprep.subr.bf16.mxu0 0
    %734 = vmatpush2.bf16.msra.mxu0 %v550
    %735 = vmatprep.subr.bf16.mxu0 0
    %736 = vmatpush2.bf16.msra.mxu0 %v549
    %737 = vmatprep.subr.bf16.mxu0 0
    %738 = vmatpush2.bf16.msra.mxu0 %v548
    %739 = vmatprep.subr.bf16.mxu0 0
    %740 = vmatpush2.bf16.msra.mxu0 %v547
    %741 = vmatprep.subr.bf16.mxu0 0
    %742 = vmatpush2.bf16.msra.mxu0 %v546
    %743 = vmatprep.subr.bf16.mxu0 0
    %744 = vmatpush2.bf16.msra.mxu0 %v545
    %745 = vmatprep.mubr.bf16.mxu0 %v236
    %746 = vmatmul.mubr.bf16.gmra.mxu0 %v222
    %v747 = vpop.f32.mrf.mxu0
    %v748 = vadd.f32 %v708, %v747
    %v749 = vpop.f32.mrf.mxu0
    %v750 = vpop.f32.mrf.mxu0
    %v751 = vpop.f32.mrf.mxu0
    %752 = vdwg.mxu0
    %753 = vmatprep.subr.bf16.mxu0 0
    %754 = vmatpush1.bf16.msra.mxu0 %v560
    %755 = vmatprep.subr.bf16.mxu0 0
    %756 = vmatpush1.bf16.msra.mxu0 %v559
    %757 = vmatprep.subr.bf16.mxu0 0
    %758 = vmatpush1.bf16.msra.mxu0 %v558
    %759 = vmatprep.subr.bf16.mxu0 0
    %760 = vmatpush1.bf16.msra.mxu0 %v557
    %761 = vmatprep.subr.bf16.mxu0 0
    %762 = vmatpush1.bf16.msra.mxu0 %v556
    %763 = vmatprep.subr.bf16.mxu0 0
    %764 = vmatpush1.bf16.msra.mxu0 %v555
    %765 = vmatprep.subr.bf16.mxu0 0
    %766 = vmatpush1.bf16.msra.mxu0 %v554
    %767 = vmatprep.subr.bf16.mxu0 0
    %768 = vmatpush1.bf16.msra.mxu0 %v553
    %769 = vmatprep.subr.bf16.mxu0 0
    %770 = vmatpush2.bf16.msra.mxu0 %v568
    %771 = vmatprep.subr.bf16.mxu0 0
    %772 = vmatpush2.bf16.msra.mxu0 %v567
    %773 = vmatprep.subr.bf16.mxu0 0
    %774 = vmatpush2.bf16.msra.mxu0 %v566
    %775 = vmatprep.subr.bf16.mxu0 0
    %776 = vmatpush2.bf16.msra.mxu0 %v565
    %777 = vmatprep.subr.bf16.mxu0 0
    %778 = vmatpush2.bf16.msra.mxu0 %v564
    %779 = vmatprep.subr.bf16.mxu0 0
    %780 = vmatpush2.bf16.msra.mxu0 %v563
    %781 = vmatprep.subr.bf16.mxu0 0
    %782 = vmatpush2.bf16.msra.mxu0 %v562
    %783 = vmatprep.subr.bf16.mxu0 0
    %784 = vmatpush2.bf16.msra.mxu0 %v561
    %785 = vmatprep.mubr.bf16.mxu0 %v240
    %786 = vmatmul.mubr.bf16.gmra.mxu0 %v238
    %v787 = vpop.f32.mrf.mxu0
    %v788 = vadd.f32 %v748, %v787
    %v789 = vpop.f32.mrf.mxu0
    %v790 = vpop.f32.mrf.mxu0
    %v791 = vpop.f32.mrf.mxu0
    %792 = vdwg.mxu0
    %v793 = vmax.f32 %v788, 0.0
    %v794 = vld [vmem:[#allocation7] sm:$0xff]
    %v795 = vld [vmem:[#allocation7 + $0x8] sm:$0xff]
    %v796 = vld [vmem:[#allocation7 + $0x10] sm:$0xff]
    %v797 = vld [vmem:[#allocation7 + $0x18] sm:$0xff]
    %v798 = vld [vmem:[#allocation7 + $0x20] sm:$0xff]
    %v799 = vld [vmem:[#allocation7 + $0x28] sm:$0xff]
    %v800 = vld [vmem:[#allocation7 + $0x30] sm:$0xff]
    %v801 = vld [vmem:[#allocation7 + $0x38] sm:$0xff]
    %v802 = vld [vmem:[#allocation7 + $0x40] sm:$0xff]
    %v803 = vld [vmem:[#allocation7 + $0x48] sm:$0xff]
    %v804 = vld [vmem:[#allocation7 + $0x50] sm:$0xff]
    %v805 = vld [vmem:[#allocation7 + $0x58] sm:$0xff]
    %v806 = vld [vmem:[#allocation7 + $0x60] sm:$0xff]
    %v807 = vld [vmem:[#allocation7 + $0x68] sm:$0xff]
    %v808 = vld [vmem:[#allocation7 + $0x70] sm:$0xff]
    %v809 = vld [vmem:[#allocation7 + $0x78] sm:$0xff]
    %v810 = vld [vmem:[%s4] sm:$0x1]
    %811 = vmatprep.subr.mxu0 0.0
    %812 = vmatpush1.msra.mxu0 %v809
    %813 = vmatprep.subr.mxu0 0.0
    %814 = vmatpush1.msra.mxu0 %v808
    %815 = vmatprep.subr.mxu0 0.0
    %816 = vmatpush1.msra.mxu0 %v807
    %817 = vmatprep.subr.mxu0 0.0
    %818 = vmatpush1.msra.mxu0 %v806
    %819 = vmatprep.subr.mxu0 0.0
    %820 = vmatpush1.msra.mxu0 %v805
    %821 = vmatprep.subr.mxu0 0.0
    %822 = vmatpush1.msra.mxu0 %v804
    %823 = vmatprep.subr.mxu0 0.0
    %824 = vmatpush1.msra.mxu0 %v803
    %825 = vmatprep.subr.mxu0 0.0
    %826 = vmatpush1.msra.mxu0 %v802
    %827 = vmatprep.subr.mxu0 0.0
    %828 = vmatpush1.msra.mxu0 %v801
    %829 = vmatprep.subr.mxu0 0.0
    %830 = vmatpush1.msra.mxu0 %v800
    %831 = vmatprep.subr.mxu0 0.0
    %832 = vmatpush1.msra.mxu0 %v799
    %833 = vmatprep.subr.mxu0 0.0
    %834 = vmatpush1.msra.mxu0 %v798
    %835 = vmatprep.subr.mxu0 0.0
    %836 = vmatpush1.msra.mxu0 %v797
    %837 = vmatprep.subr.mxu0 0.0
    %838 = vmatpush1.msra.mxu0 %v796
    %839 = vmatprep.subr.mxu0 0.0
    %840 = vmatpush1.msra.mxu0 %v795
    %841 = vmatprep.subr.mxu0 0.0
    %842 = vmatpush1.msra.mxu0 %v794
    %843 = vmatprep.subr.mxu0 0.0
    %844 = vmatpush2.msra.mxu0 0.0
    %845 = vmatprep.subr.mxu0 0.0
    %846 = vmatpush2.msra.mxu0 0.0
    %847 = vmatprep.subr.mxu0 0.0
    %848 = vmatpush2.msra.mxu0 0.0
    %849 = vmatprep.subr.mxu0 0.0
    %850 = vmatpush2.msra.mxu0 0.0
    %851 = vmatprep.subr.mxu0 0.0
    %852 = vmatpush2.msra.mxu0 0.0
    %853 = vmatprep.subr.mxu0 0.0
    %854 = vmatpush2.msra.mxu0 0.0
    %855 = vmatprep.subr.mxu0 0.0
    %856 = vmatpush2.msra.mxu0 0.0
    %857 = vmatprep.subr.mxu0 0.0
    %858 = vmatpush2.msra.mxu0 0.0
    %859 = vmatprep.subr.mxu0 0.0
    %860 = vmatpush2.msra.mxu0 0.0
    %861 = vmatprep.subr.mxu0 0.0
    %862 = vmatpush2.msra.mxu0 0.0
    %863 = vmatprep.subr.mxu0 0.0
    %864 = vmatpush2.msra.mxu0 0.0
    %865 = vmatprep.subr.mxu0 0.0
    %866 = vmatpush2.msra.mxu0 0.0
    %867 = vmatprep.subr.mxu0 0.0
    %868 = vmatpush2.msra.mxu0 0.0
    %869 = vmatprep.subr.mxu0 0.0
    %870 = vmatpush2.msra.mxu0 0.0
    %871 = vmatprep.subr.mxu0 0.0
    %872 = vmatpush2.msra.mxu0 0.0
    %873 = vmatprep.subr.mxu0 0.0
    %874 = vmatpush2.msra.mxu0 0.0
    %875 = vmatprep.mubr.f32.mxu0 0.0
    %876 = vmatmul.mubr.f32.gmra.mxu0 %v793
    %v877 = vpop.f32.mrf.mxu0
    %v878 = vadd.f32 %v810, %v877
    %v879 = vpop.f32.mrf.mxu0
    %880 = vdwg.mxu0
    %v881 = vxor.u32 %v878, 2147483648
    %v882 = vmul.f32 %v881, 1.442695
    %v883 = vpow.pop %v882
    %v884 = vadd.f32 %v883, 1.0
    %v885 = vrcp.pop %v884
    %v886 = vmul.f32 1.0, %v885
    %887 = vst [vmem:[#allocation8] sm:$0x1] %v886
    // Predicated region
    $region34: #{tpu_custom_call.1} parent=1 // pred_check
      _
    $region35: #{tpu_custom_call.1} parent=1 // pred_check_branch
      %889 = sbr.rel (0) target = $region37
    $region36: #{tpu_custom_call.1} parent=1 // pred_region
      %s891 = ssub.s32 16, 16
      %892 = vsyncadd [#allocation4], %s891
      %s894 = sshll.u32 [#allocation8], 4
      %s895 = int_to_ptr.vmem [resolvable:$true] %s894
      %897 = dma.vmem_to_hbm [thread:$0]  %s895, 16, %s5, [#allocation4]
    $region37: #{tpu_custom_call.1} parent=1 // pred_fallthru
      _
    // Predicated region
    $region38: #{tpu_custom_call.1} parent=1 // pred_check
      _
    $region39: #{tpu_custom_call.1} parent=1 // pred_check_branch
      %899 = sbr.rel (0) target = $region41
    $region40: #{tpu_custom_call.1} parent=1 // pred_region
      %900 = dma.done [#allocation4], 16
    $region41: #{tpu_custom_call.1} parent=1 // pred_fallthru
      _
    %901 = vsyncpa [#allocation3], 1
    %902 = vsyncpa [#allocation6], 1
    %903 = vsyncpa [#allocation4], 1

</llo_original>
